<compile_context>
chip_gen: v7x
topology: tpu7x:2x2x1
jax: 0.10.0
libtpu: 0.0.40
codegen_flags: <defaults>
</compile_context>

<pallas_src>
import functools

import jax
import jax.numpy as jnp
from jax.experimental import pallas as pl
from jax.experimental.pallas import tpu as pltpu

_EPS = 1e-5


def _round_up(x, m):
    return ((x + m - 1) // m) * m


def _vmem_capacity_bytes():
    try:
        return int(pltpu.get_tpu_info().vmem_capacity_bytes)
    except Exception:
        return 64 << 20  # conservative (v7x per-TensorCore VMEM)


# --------------------------------------------------------------------------- #
# Kernels
# --------------------------------------------------------------------------- #
def _stats_kernel(x_ref, sum_ref, sumsq_ref, *, t_tile, seq_len):
    """Pass 1: per-(batch, channel) streaming sum / sum-of-squares over T.

    Grid = (B, num_t_tiles); B is "parallel", T is "arbitrary" (accumulator).
    The ragged final T tile is masked so unspecified partial-block reads never
    enter the sums.
    """
    t = pl.program_id(1)

    @pl.when(t == 0)
    def _init():
        sum_ref[...] = jnp.zeros_like(sum_ref)
        sumsq_ref[...] = jnp.zeros_like(sumsq_ref)

    x = x_ref[...].astype(jnp.float32)                       # (1, C, t_tile)
    if seq_len % t_tile != 0:
        col = jax.lax.broadcasted_iota(jnp.int32, x.shape, 2) + t * t_tile
        x = jnp.where(col < seq_len, x, 0.0)
    s = jnp.sum(x, axis=2)                                   # (1, C)
    sq = jnp.sum(x * x, axis=2)                              # (1, C)
    sum_ref[...] += s[:, None, :]                            # (1, 1, C)
    sumsq_ref[...] += sq[:, None, :]                         # (1, 1, C)


def _affine_kernel(x_ref, scale_ref, shift_ref, o_ref):
    """Pass 2: out = x * scale + shift, per-(batch, channel) scale/shift.

    Partial-block writes past T are dropped by Pallas, so no masking needed.
    """
    scale = scale_ref[...]                                   # (1, C, 1)
    shift = shift_ref[...]                                   # (1, C, 1)
    o_ref[...] = (x_ref[...].astype(jnp.float32) * scale + shift).astype(o_ref.dtype)


def _fused_kernel(x_ref, gamma_ref, beta_ref, o_ref):
    """Fused single-block path: stats + folded conditional affine."""
    x = x_ref[...].astype(jnp.float32)
    B, C, T = x.shape
    inv_n = 1.0 / float(B * T)
    s = jnp.sum(x, axis=(0, 2), keepdims=True)               # (1, C, 1)
    sq = jnp.sum(x * x, axis=(0, 2), keepdims=True)          # (1, C, 1)
    mean = s * inv_n
    var = jnp.maximum(sq * inv_n - mean * mean, 0.0)         # biased variance
    rstd = jax.lax.rsqrt(var + _EPS)
    scale = gamma_ref[...][:, :, None] * rstd                # (B, C, 1)
    shift = beta_ref[...][:, :, None] - mean * scale         # (B, C, 1)
    o_ref[...] = (x * scale + shift).astype(o_ref.dtype)


# --------------------------------------------------------------------------- #
# Parameter setup glue (spectral norm of the conditioning Linear)
# --------------------------------------------------------------------------- #
def spectral_normalize(w, u, n_power_iterations=1, eps=1e-12):
    """PyTorch-style spectral norm of a (out, in) weight matrix."""
    v = None
    for _ in range(n_power_iterations):
        v = w.T @ u
        v = v / (jnp.linalg.norm(v) + eps)
        u = w @ v
        u = u / (jnp.linalg.norm(u) + eps)
    sigma = u @ (w @ v)
    return w / sigma


# --------------------------------------------------------------------------- #
# Tile sizing
# --------------------------------------------------------------------------- #
def _choose_t_tile(C, T, in_itemsize, out_itemsize, vmem_cap, requested=None):
    """Pick a lane-dense T tile from real per-pass double-buffer accounting."""
    if requested is not None:
        t = max(128, (int(requested) // 128) * 128)
        return T if t >= T else t
    if T <= 256:
        return T                                   # one block == full dim
    budget = int(0.55 * vmem_cap)
    # Pass-2 working set per T lane: 2x in blk + 2x out blk (double-buffered)
    # + ~2x f32 temps for the elementwise compute.
    per_lane = max(1, C * (2 * in_itemsize + 2 * out_itemsize + 2 * 4))
    t = (budget // per_lane) // 128 * 128
    t = max(128, min(t, 8192))                     # grow path, sane upper cap
    return T if t >= T else t


# --------------------------------------------------------------------------- #
# Wrapper
# --------------------------------------------------------------------------- #
def conditional_batch_norm_1d(x, z, weight_sn, bias, *, t_tile=None,
                              force_tiled=False):
    """x: (B, C, T), z: (B, Z), weight_sn: (2C, Z) spectrally-normalized,
    bias: (2C,). Returns (B, C, T)."""
    B, C, T = x.shape
    n = B * T
    vmem_cap = _vmem_capacity_bytes()

    # Conditioning linear: tiny and badly MXU-shaped -> plain XLA, done once.
    gb = (z.astype(jnp.float32) @ weight_sn.T.astype(jnp.float32)
          + bias.astype(jnp.float32))                          # (B, 2C)
    gamma, beta = gb[:, :C], gb[:, C:]                         # (B, C) each

    # ---- fused single-block path when whole x comfortably fits in VMEM ----
    in_bytes = B * C * T * x.dtype.itemsize
    out_bytes = in_bytes
    x_f32_bytes = B * C * T * 4
    fused_need = in_bytes + out_bytes + 2 * x_f32_bytes + (2 << 20)
    if not force_tiled and fused_need <= int(0.8 * vmem_cap):
        vmem_spec = pl.BlockSpec(memory_space=pltpu.MemorySpace.VMEM)
        return pl.pallas_call(
            _fused_kernel,
            out_shape=jax.ShapeDtypeStruct((B, C, T), x.dtype),
            in_specs=[vmem_spec] * 3,
            out_specs=vmem_spec,
            compiler_params=pltpu.CompilerParams(
                vmem_limit_bytes=int(0.9 * vmem_cap)),
        )(x, gamma, beta)

    # ---- tiled two-pass streaming path (no padding, no output slice) ----
    tile = _choose_t_tile(C, T, x.dtype.itemsize, x.dtype.itemsize,
                          vmem_cap, t_tile)
    grid_t = pl.cdiv(T, tile)
    vmem_limit = int(0.85 * vmem_cap)

    # Pass 1: per-batch partial sum / sumsq accumulators (lane-dense (B,1,C)),
    # B "parallel" (sharded across TensorCores), T "arbitrary" (accumulator).
    stats_kernel = functools.partial(_stats_kernel, t_tile=tile, seq_len=T)
    psum, psumsq = pl.pallas_call(
        stats_kernel,
        out_shape=(jax.ShapeDtypeStruct((B, 1, C), jnp.float32),
                   jax.ShapeDtypeStruct((B, 1, C), jnp.float32)),
        grid=(B, grid_t),
        in_specs=[pl.BlockSpec((1, C, tile), lambda b, t: (b, 0, t))],
        out_specs=(pl.BlockSpec((1, 1, C), lambda b, t: (b, 0, 0)),
                   pl.BlockSpec((1, 1, C), lambda b, t: (b, 0, 0))),
        compiler_params=pltpu.CompilerParams(
            dimension_semantics=("parallel", "arbitrary"),
            vmem_limit_bytes=vmem_limit),
    )(x)

    # Tiny cross-batch reduce + scale/shift fold -> plain XLA.
    ssum = jnp.sum(psum[:, 0, :], axis=0)                       # (C,)
    ssumsq = jnp.sum(psumsq[:, 0, :], axis=0)                   # (C,)
    mean = ssum / n
    var = jnp.maximum(ssumsq / n - mean * mean, 0.0)            # biased variance
    rstd = jax.lax.rsqrt(var + _EPS)
    scale = (gamma * rstd[None, :])[:, :, None]                 # (B, C, 1)
    shift = (beta - mean[None, :] * gamma * rstd[None, :])[:, :, None]

    # Pass 2: streaming normalize + affine; both grid axes "parallel".
    out = pl.pallas_call(
        _affine_kernel,
        out_shape=jax.ShapeDtypeStruct((B, C, T), x.dtype),
        grid=(B, grid_t),
        in_specs=[pl.BlockSpec((1, C, tile), lambda b, t: (b, 0, t)),
                  pl.BlockSpec((1, C, 1), lambda b, t: (b, 0, 0)),
                  pl.BlockSpec((1, C, 1), lambda b, t: (b, 0, 0))],
        out_specs=pl.BlockSpec((1, C, tile), lambda b, t: (b, 0, t)),
        compiler_params=pltpu.CompilerParams(
            dimension_semantics=("parallel", "parallel"),
            vmem_limit_bytes=vmem_limit),
    )(x, scale, shift)
    return out


# --------------------------------------------------------------------------- #
# Demo / correctness check
# --------------------------------------------------------------------------- #
if __name__ == "__main__":
    Z = 128                       # z_channels (module default)
    B, C, T = 2, 8, 16            # batch, num_features, time (small demo)

    key = jax.random.PRNGKey(0)
    kx, kz, kw, ku, kx2 = jax.random.split(key, 5)

    x = jax.random.normal(kx, (B, C, T), dtype=jnp.float32)
    z = jax.random.normal(kz, (B, Z), dtype=jnp.float32)

    # Parameter init matching the module's __init__:
    #   layer.weight ~ N(1, 0.02), layer.bias = 0, then spectral_norm wrapping.
    w_raw = 1.0 + 0.02 * jax.random.normal(kw, (2 * C, Z), dtype=jnp.float32)
    bias = jnp.zeros((2 * C,), dtype=jnp.float32)
    u0 = jax.random.normal(ku, (2 * C,), dtype=jnp.float32)
    u0 = u0 / (jnp.linalg.norm(u0) + 1e-12)
    w_sn = spectral_normalize(w_raw, u0, n_power_iterations=1)

    def ref_fn(xx, zz):
        mean = jnp.mean(xx, axis=(0, 2), keepdims=True)
        var = jnp.mean((xx - mean) ** 2, axis=(0, 2), keepdims=True)
        xh = (xx - mean) * jax.lax.rsqrt(var + _EPS)
        gb = zz @ w_sn.T + bias
        cc = xx.shape[1]
        return gb[:, :cc, None] * xh + gb[:, cc:, None]

    # Fused (whole-x-in-VMEM) path.
    out_fused = jax.block_until_ready(conditional_batch_norm_1d(x, z, w_sn, bias))
    assert jnp.allclose(out_fused, ref_fn(x, z), atol=1e-4, rtol=1e-4), \
        "fused path mismatch vs reference"

    # Tiled streaming path (ragged T -> masked final tile, grid > 1, both passes).
    T2 = 300
    x2 = jax.random.normal(kx2, (B, C, T2), dtype=jnp.float32)
    out_tiled = jax.block_until_ready(
        conditional_batch_norm_1d(x2, z, w_sn, bias, t_tile=128, force_tiled=True))
    assert jnp.allclose(out_tiled, ref_fn(x2, z), atol=1e-4, rtol=1e-4), \
        "tiled path mismatch vs reference"

    print("KERNEL_OK")
</pallas_src>

<mosaic_0001>
module attributes {stable_mosaic.version = 11 : i64} {
  func.func @_fused_kernel(%arg0: memref<2x8x16xf32, #tpu.memory_space<vmem>>, %arg1: memref<2x8xf32, #tpu.memory_space<vmem>>, %arg2: memref<2x8xf32, #tpu.memory_space<vmem>>, %arg3: memref<2x8x16xf32, #tpu.memory_space<vmem>>) attributes {dimension_semantics = [], scalar_prefetch = 0 : i64, scratch_operands = 0 : i64, tpu.core_type = #tpu.core_type<tc>} {
    %c0 = arith.constant 0 : index
    %c0_0 = arith.constant 0 : index
    %c0_1 = arith.constant 0 : index
    %0 = vector.load %arg0[%c0, %c0_0, %c0_1] : memref<2x8x16xf32, #tpu.memory_space<vmem>>, vector<2x8x16xf32>
    %cst = arith.constant dense<0.000000e+00> : vector<8xf32>
    %1 = vector.multi_reduction <add>, %0, %cst [0, 2] : vector<2x8x16xf32> to vector<8xf32>
    %2 = vector.shape_cast %1 : vector<8xf32> to vector<1x8x1xf32>
    %3 = arith.mulf %0, %0 : vector<2x8x16xf32>
    %cst_2 = arith.constant dense<0.000000e+00> : vector<8xf32>
    %4 = vector.multi_reduction <add>, %3, %cst_2 [0, 2] : vector<2x8x16xf32> to vector<8xf32>
    %5 = vector.shape_cast %4 : vector<8xf32> to vector<1x8x1xf32>
    %cst_3 = arith.constant 3.125000e-02 : f32
    %6 = vector.broadcast %cst_3 : f32 to vector<1x8x1xf32>
    %7 = arith.mulf %2, %6 : vector<1x8x1xf32>
    %cst_4 = arith.constant 3.125000e-02 : f32
    %8 = vector.broadcast %cst_4 : f32 to vector<1x8x1xf32>
    %9 = arith.mulf %5, %8 : vector<1x8x1xf32>
    %10 = arith.mulf %7, %7 : vector<1x8x1xf32>
    %11 = arith.subf %9, %10 : vector<1x8x1xf32>
    %cst_5 = arith.constant 0.000000e+00 : f32
    %12 = vector.broadcast %cst_5 : f32 to vector<1x8x1xf32>
    %13 = arith.maximumf %11, %12 : vector<1x8x1xf32>
    %cst_6 = arith.constant 9.99999974E-6 : f32
    %14 = vector.broadcast %cst_6 : f32 to vector<1x8x1xf32>
    %15 = arith.addf %13, %14 : vector<1x8x1xf32>
    %16 = math.rsqrt %15 : vector<1x8x1xf32>
    %c0_7 = arith.constant 0 : index
    %c0_8 = arith.constant 0 : index
    %17 = vector.load %arg1[%c0_7, %c0_8] : memref<2x8xf32, #tpu.memory_space<vmem>>, vector<2x8xf32>
    %18 = vector.shape_cast %17 : vector<2x8xf32> to vector<2x8x1xf32>
    %19 = vector.broadcast %16 : vector<1x8x1xf32> to vector<2x8x1xf32>
    %20 = arith.mulf %18, %19 : vector<2x8x1xf32>
    %c0_9 = arith.constant 0 : index
    %c0_10 = arith.constant 0 : index
    %21 = vector.load %arg2[%c0_9, %c0_10] : memref<2x8xf32, #tpu.memory_space<vmem>>, vector<2x8xf32>
    %22 = vector.shape_cast %21 : vector<2x8xf32> to vector<2x8x1xf32>
    %23 = vector.broadcast %7 : vector<1x8x1xf32> to vector<2x8x1xf32>
    %24 = arith.mulf %23, %20 : vector<2x8x1xf32>
    %25 = arith.subf %22, %24 : vector<2x8x1xf32>
    %26 = vector.broadcast %20 : vector<2x8x1xf32> to vector<2x8x16xf32>
    %27 = arith.mulf %0, %26 : vector<2x8x16xf32>
    %28 = vector.broadcast %25 : vector<2x8x1xf32> to vector<2x8x16xf32>
    %29 = arith.addf %27, %28 : vector<2x8x16xf32>
    %c0_11 = arith.constant 0 : index
    %c0_12 = arith.constant 0 : index
    %c0_13 = arith.constant 0 : index
    %30 = vector.load %arg3[%c0_11, %c0_12, %c0_13] : memref<2x8x16xf32, #tpu.memory_space<vmem>>, vector<2x8x16xf32>
    tpu.vector_store %arg3[%c0_11, %c0_12, %c0_13], %29 {strides = array<i32>} : memref<2x8x16xf32, #tpu.memory_space<vmem>>, vector<2x8x16xf32>,
    return
  }
}

</mosaic_0001>

<llo_original>
// kernel: tpu_custom_call.1
$region0: #{tpu_custom_call.1}
  #allocation0 [shape = 'u32[]', space=smem, size = 0x4, offset = 0x4, fixed_abs, tag = 'smem constant byte address 0x4 - core index']
  #allocation1 [shape = 'u32[144,128]{1,0:T(1,128)}', space=vmem, size = 0x12000, scoped, tag = 'internal scratch']
  %s0 = inlined_call_operand.hbm [shape: f32[2,8,16], index: 0, kind: input, shape index: {}]
  %s1 = inlined_call_operand.vmem [shape: f32[2,8], index: 1, kind: input, shape index: {}]
  %s2 = inlined_call_operand.vmem [shape: f32[2,8], index: 2, kind: input, shape index: {}]
  %s3 = inlined_call_operand.hbm [shape: f32[2,8,16], index: 3, kind: output, shape index: {}]
  %s4 = sld [smem:[#allocation0]]
  $region26: #{tpu_custom_call.1} parent=0
    _
  %s6 = ssub.s32 1, %s4
  %s7 = scalar_select 0, %s6, %s4
  $region1: #{tpu_custom_call.1} parent=0
    #allocation2 [shape = 'u8[8192]{0}', space=vmem, size = 0x2000, scoped, tag = 'input window, operand 0, single buffered']
    #allocation3 [shape = 's32[1]{0}', space=sflag, size = 0x4, scoped, tag = 'scoped memory for tpu_custom_call.1']
    #allocation4 [shape = 's32[1]{0}', space=sflag, size = 0x4, scoped, tag = 'scoped memory for tpu_custom_call.1']
    #allocation5 [shape = 'u8[8192]{0}', space=vmem, size = 0x2000, scoped, tag = 'output window, operand 0, single buffered']
    %8 = vsyncpa [#allocation3], 0
    %9 = vsyncpa [#allocation4], 0
    // Predicated region
    $region2: #{tpu_custom_call.1} parent=1 // pred_check
      _
    $region3: #{tpu_custom_call.1} parent=1 // pred_check_branch
      %11 = sbr.rel (0) target = $region5
    $region4: #{tpu_custom_call.1} parent=1 // pred_region
      %s13 = ssub.s32 256, 256
      %14 = vsyncadd [#allocation3], %s13
      %s15 = sshll.u32 [#allocation2], 4
      %s16 = int_to_ptr.vmem [resolvable:$true] %s15
      %21 = dma.hbm_to_vmem [thread:$0]  %s0, 256, %s16, [#allocation3], 128, 128, 8
    $region5: #{tpu_custom_call.1} parent=1 // pred_fallthru
      _
    // Predicated region
    $region6: #{tpu_custom_call.1} parent=1 // pred_check
      _
    $region7: #{tpu_custom_call.1} parent=1 // pred_check_branch
      %23 = sbr.rel (0) target = $region9
    $region8: #{tpu_custom_call.1} parent=1 // pred_region
      _
    $region9: #{tpu_custom_call.1} parent=1 // pred_fallthru
      _
    // Predicated region
    $region10: #{tpu_custom_call.1} parent=1 // pred_check
      _
    $region11: #{tpu_custom_call.1} parent=1 // pred_check_branch
      %25 = sbr.rel (0) target = $region13
    $region12: #{tpu_custom_call.1} parent=1 // pred_region
      _
    $region13: #{tpu_custom_call.1} parent=1 // pred_fallthru
      _
    // Predicated region
    $region14: #{tpu_custom_call.1} parent=1 // pred_check
      _
    $region15: #{tpu_custom_call.1} parent=1 // pred_check_branch
      %27 = sbr.rel (0) target = $region17
    $region16: #{tpu_custom_call.1} parent=1 // pred_region
      %28 = dma.done [#allocation3], 256
    $region17: #{tpu_custom_call.1} parent=1 // pred_fallthru
      _
    %v29 = vld [vmem:[#allocation2] sm:$0xff]
    %v30 = vld [vmem:[#allocation2 + $0x8] sm:$0xff]
    %vm31 = vcmask 130048
    %v32 = vsel %vm31, %v29, 0.0
    %v33 = vsel %vm31, %v30, 0.0
    %v34 = vadd.f32 %v32, %v33
    %35 = vadd.xlane.f32.xlu0 %v34
    %v36 = vpop.xlane.xlu0 %35
    %v37 = vmul.f32 %v29, %v29
    %v38 = vmul.f32 %v30, %v30
    %v39 = vsel %vm31, %v37, 0.0
    %v40 = vsel %vm31, %v38, 0.0
    %v41 = vadd.f32 %v39, %v40
    %42 = vadd.xlane.f32.xlu0 %v41
    %v43 = vpop.xlane.xlu0 %42
    %v44 = vmul.f32 %v36, 0.03125
    %v45 = vmul.f32 %v43, 0.03125
    %v46 = vmul.f32 %v44, %v44
    %v47 = vsub.f32 %v45, %v46
    %v48 = vmax.f32 %v47, 0.0
    %v49 = vadd.f32 %v48, 1e-05
    %v50 = vrsqrt.pop %v49
    %v51 = vld [vmem:[%s1] sm:$0x3]
    %v52 = vlaneseq
    %v53 = vshrl.u32 %v52, 7
    %v54 = vsub.s32 0, %v53
    %v55 = vrot.slane %v51, %v54
    %57 = vbcast.lane.b32.xlu0 %v55, 256
    %v58 = vpop.permute.xlu0 %57
    %v59 = vlaneseq
    %v60 = vshrl.u32 %v59, 7
    %v61 = vsub.s32 1, %v60
    %v62 = vrot.slane %v51, %v61
    %64 = vbcast.lane.b32.xlu0 %v62, 256
    %v65 = vpop.permute.xlu0 %64
    %v66 = vmul.f32 %v58, %v50
    %v67 = vmul.f32 %v65, %v50
    %v68 = vld [vmem:[%s2] sm:$0x3]
    %v69 = vlaneseq
    %v70 = vshrl.u32 %v69, 7
    %v71 = vsub.s32 0, %v70
    %v72 = vrot.slane %v68, %v71
    %74 = vbcast.lane.b32.xlu0 %v72, 256
    %v75 = vpop.permute.xlu0 %74
    %v76 = vlaneseq
    %v77 = vshrl.u32 %v76, 7
    %v78 = vsub.s32 1, %v77
    %v79 = vrot.slane %v68, %v78
    %81 = vbcast.lane.b32.xlu0 %v79, 256
    %v82 = vpop.permute.xlu0 %81
    %v83 = vmul.f32 %v44, %v66
    %v84 = vmul.f32 %v44, %v67
    %v85 = vsub.f32 %v75, %v83
    %v86 = vsub.f32 %v82, %v84
    %v87 = vmul.f32 %v29, %v66
    %v88 = vmul.f32 %v30, %v67
    %v89 = vadd.f32 %v87, %v85
    %v90 = vadd.f32 %v88, %v86
    %91 = vst.msk [vmem:[#allocation5] sm:$0xff] %vm31, %v89
    %92 = vst.msk [vmem:[#allocation5 + $0x8] sm:$0xff] %vm31, %v90
    // Predicated region
    $region18: #{tpu_custom_call.1} parent=1 // pred_check
      _
    $region19: #{tpu_custom_call.1} parent=1 // pred_check_branch
      %94 = sbr.rel (0) target = $region21
    $region20: #{tpu_custom_call.1} parent=1 // pred_region
      %s96 = ssub.s32 256, 256
      %97 = vsyncadd [#allocation4], %s96
      %s98 = sshll.u32 [#allocation5], 4
      %s99 = int_to_ptr.vmem [resolvable:$true] %s98
      %104 = dma.vmem_to_hbm [thread:$0]  %s99, 256, %s3, [#allocation4], 128, 128, 8
    $region21: #{tpu_custom_call.1} parent=1 // pred_fallthru
      _
    // Predicated region
    $region22: #{tpu_custom_call.1} parent=1 // pred_check
      _
    $region23: #{tpu_custom_call.1} parent=1 // pred_check_branch
      %106 = sbr.rel (0) target = $region25
    $region24: #{tpu_custom_call.1} parent=1 // pred_region
      %107 = dma.done [#allocation4], 256
    $region25: #{tpu_custom_call.1} parent=1 // pred_fallthru
      _
    %108 = vsyncpa [#allocation3], 1
    %109 = vsyncpa [#allocation4], 1

</llo_original>
